<compile_context>
chip_gen: v7x
topology: tpu7x:2x2x1
jax: 0.10.0
libtpu: 0.0.40
codegen_flags: <defaults>
</compile_context>

<pallas_src>
import functools

import jax
import jax.numpy as jnp
from jax.experimental import pallas as pl
from jax.experimental.pallas import tpu as pltpu


_SUPPORTED_ACTIVATIONS = ("tanh", "relu", "relu6", "elu", "lrelu", "linear")
_NEG_BIG = -1e30  # finite "-inf" baked into padded columns of the last bias


def _round_up(x, m):
    return ((x + m - 1) // m) * m


def _apply_activation(y, activation):
    if activation == "tanh":
        return jnp.tanh(y)
    if activation == "relu":
        return jnp.maximum(y, 0.0)
    if activation == "relu6":
        return jnp.clip(y, 0.0, 6.0)
    if activation == "elu":
        # TODO(synk): expm1 on unselected large positives is fine for forward;
        # guard the branch if a custom VJP is ever added.
        return jnp.where(y > 0.0, y, jnp.expm1(y))
    if activation == "lrelu":
        return jnp.where(y > 0.0, y, 0.01 * y)
    if activation == "linear":
        return y
    raise ValueError("Activation Function not supported...")


# ---------------------------------------------------------------------------
# Fused kernel: whole MLP for one batch tile, weights VMEM-resident
# ---------------------------------------------------------------------------

def _fused_fnn_kernel(*refs, num_linear, activation, record):
    """inputs : x_tile, (W_0, b_0), ..., (W_{L-1}, b_{L-1})   W_i is [in_pad, out_pad]
       outputs: logits_tile, probs_tile [, hidden_0, ..., hidden_{L-2}] (padded)"""
    n_in = 1 + 2 * num_linear
    in_refs, out_refs = refs[:n_in], refs[n_in:]
    x_ref = in_refs[0]
    logits_ref, probs_ref = out_refs[0], out_refs[1]
    hidden_refs = out_refs[2:]

    x = x_ref[...]                                           # [TILE_B, in_pad]

    # Hidden layers: activations never leave VMEM between layers.
    for i in range(num_linear - 1):
        w = in_refs[1 + 2 * i][...]                          # [in_pad, out_pad]
        b = in_refs[2 + 2 * i][...]                          # [1, out_pad]
        y = jnp.dot(x, w, preferred_element_type=jnp.float32) + b
        y = _apply_activation(y, activation)
        if record:
            hidden_refs[i][...] = y.astype(hidden_refs[i].dtype)
        x = y

    # Final linear + softmax. Padded class columns carry a -1e30 bias, so
    # exp(logit - max) underflows to 0 there -> no explicit masking needed.
    w = in_refs[1 + 2 * (num_linear - 1)][...]
    b = in_refs[2 + 2 * (num_linear - 1)][...]
    logits = jnp.dot(x, w, preferred_element_type=jnp.float32) + b

    m = jnp.max(logits, axis=-1, keepdims=True)
    e = jnp.exp(logits - m)
    denom = jnp.sum(e, axis=-1, keepdims=True)
    # EUP approximate reciprocal + one Newton refinement -> f32-accurate.
    r = pl.reciprocal(denom, approx=True)
    r = r * (2.0 - denom * r)
    probs = e * r

    logits_ref[...] = logits.astype(logits_ref.dtype)
    probs_ref[...] = probs.astype(probs_ref.dtype)


# ---------------------------------------------------------------------------
# One-time parameter packing (transpose + pad hoisted out of the call path)
# ---------------------------------------------------------------------------

def pack_fnn_params(params, in_features):
    """Pre-transpose weights to [in, out] and pad to (8,128)-friendly tiles.
    The last bias's padded class columns are filled with -1e30 so the kernel
    needs no softmax mask. Call once; reuse the result for every forward."""
    num_linear = len(params)
    sizes = [in_features] + [w.shape[0] for w, _ in params]   # true layer widths
    pad = [_round_up(s, 128) for s in sizes]                  # lane-dense widths

    packed = []
    for i, (w, b) in enumerate(params):
        wt = jnp.pad(jnp.asarray(w, jnp.float32).T,
                     ((0, pad[i] - sizes[i]), (0, pad[i + 1] - sizes[i + 1])))
        col_pad = pad[i + 1] - sizes[i + 1]
        fill = _NEG_BIG if (i == num_linear - 1) else 0.0
        bp = jnp.pad(jnp.asarray(b, jnp.float32), (0, col_pad),
                     constant_values=fill).reshape(1, pad[i + 1])
        packed.append((wt, bp))
    return {"weights": packed, "sizes": sizes, "pad": pad}


# ---------------------------------------------------------------------------
# Forward wrapper: batch-tiled grid, weights VMEM-resident
# ---------------------------------------------------------------------------

def fnn_forward(packed, x, activation="tanh", training=False,
                hidden_dtype=jnp.float32):
    if activation not in _SUPPORTED_ACTIVATIONS:
        raise ValueError("Activation Function not supported...")

    weights, sizes, pad = packed["weights"], packed["sizes"], packed["pad"]
    num_linear = len(weights)
    B = x.shape[0]
    record = not training

    # Batch tile: 256 fills the v6e/v7x MXU for large batches; tiny batches get
    # a single sublane-rounded tile (no wasted compute on the demo).
    TILE_B = 256 if B >= 256 else _round_up(max(B, 1), 8)
    Bp = _round_up(B, TILE_B)
    num_tiles = Bp // TILE_B

    xp = jnp.pad(jnp.asarray(x, jnp.float32),
                 ((0, Bp - B), (0, pad[0] - sizes[0])))

    # --- specs: x/outputs tiled along batch; weights pinned (constant block) ---
    inputs = [xp]
    in_specs = [pl.BlockSpec((TILE_B, pad[0]), lambda i: (i, 0))]
    for wt, bp in weights:
        inputs += [wt, bp]
        in_specs += [pl.BlockSpec(wt.shape, lambda i: (0, 0)),
                     pl.BlockSpec(bp.shape, lambda i: (0, 0))]

    out_shapes = [jax.ShapeDtypeStruct((Bp, pad[-1]), jnp.float32),   # logits
                  jax.ShapeDtypeStruct((Bp, pad[-1]), jnp.float32)]   # probs
    out_specs = [pl.BlockSpec((TILE_B, pad[-1]), lambda i: (i, 0)),
                 pl.BlockSpec((TILE_B, pad[-1]), lambda i: (i, 0))]
    if record:
        for i in range(num_linear - 1):
            out_shapes.append(jax.ShapeDtypeStruct((Bp, pad[i + 1]), hidden_dtype))
            out_specs.append(pl.BlockSpec((TILE_B, pad[i + 1]), lambda i: (i, 0)))

    # --- VMEM budget: resident weights + double-buffered batch tiles ---
    weight_bytes = sum(wt.size + bp.size for wt, bp in weights) * 4
    out_tile_elems = 2 * TILE_B * pad[-1]
    if record:
        out_tile_elems += sum(TILE_B * pad[i + 1] for i in range(num_linear - 1))
    tile_bytes = (TILE_B * pad[0] + out_tile_elems) * 4
    vmem_limit = int(min(64 * (1 << 20),
                         weight_bytes + 4 * tile_bytes + (4 << 20)))

    kernel = functools.partial(
        _fused_fnn_kernel, num_linear=num_linear, activation=activation,
        record=record)

    results = pl.pallas_call(
        kernel,
        grid=(num_tiles,),
        out_shape=tuple(out_shapes),
        in_specs=in_specs,
        out_specs=tuple(out_specs),
        compiler_params=pltpu.CompilerParams(
            dimension_semantics=("parallel",),
            vmem_limit_bytes=vmem_limit),
    )(*inputs)

    logits = results[0][:B, :sizes[-1]]
    probs = results[1][:B, :sizes[-1]]
    activations = []
    if record:
        for i in range(num_linear - 1):
            activations.append(results[2 + i][:B, :sizes[i + 1]])
        activations.append(probs)
    return logits, probs, activations


# ---------------------------------------------------------------------------
# Parameter init (mimics nn.Linear: U(-1/sqrt(fan_in), 1/sqrt(fan_in)))
# ---------------------------------------------------------------------------

def init_fnn_params(layer_sizes, key):
    params = []
    for i in range(len(layer_sizes) - 1):
        fan_in, fan_out = layer_sizes[i], layer_sizes[i + 1]
        key, kw, kb = jax.random.split(key, 3)
        bound = 1.0 / jnp.sqrt(fan_in)
        w = jax.random.uniform(kw, (fan_out, fan_in), jnp.float32, -bound, bound)
        b = jax.random.uniform(kb, (fan_out,), jnp.float32, -bound, bound)
        params.append((w, b))
    return params


def _reference_forward(params, x, activation="tanh"):
    act = {"tanh": jnp.tanh,
           "relu": lambda v: jnp.maximum(v, 0.0),
           "relu6": lambda v: jnp.clip(v, 0.0, 6.0),
           "elu": lambda v: jnp.where(v > 0.0, v, jnp.expm1(v)),
           "lrelu": lambda v: jnp.where(v > 0.0, v, 0.01 * v),
           "linear": lambda v: v}[activation]
    hidden = []
    h = x
    for w, b in params[:-1]:
        h = act(h @ w.T + b)
        hidden.append(h)
    logits = h @ params[-1][0].T + params[-1][1]
    probs = jax.nn.softmax(logits, axis=-1)
    return logits, probs, hidden


# ---------------------------------------------------------------------------
# Main
# ---------------------------------------------------------------------------

if __name__ == "__main__":
    key = jax.random.PRNGKey(0)

    layer_sizes = [32, 64, 64, 16]   # input 32 -> hidden 64 -> hidden 64 -> 16 classes
    key, kp = jax.random.split(key)
    params = init_fnn_params(layer_sizes, kp)
    packed = pack_fnn_params(params, layer_sizes[0])   # packed ONCE, reused below

    def check(batch, kx):
        x = jax.random.normal(kx, (batch, layer_sizes[0]), jnp.float32)
        logits, probs, acts = fnn_forward(packed, x, activation="tanh",
                                          training=False)
        jax.block_until_ready(logits)
        jax.block_until_ready(probs)
        for a in acts:
            jax.block_until_ready(a)

        ref_logits, ref_probs, ref_hidden = _reference_forward(params, x, "tanh")
        assert logits.shape == (batch, layer_sizes[-1])
        assert probs.shape == (batch, layer_sizes[-1])
        assert len(acts) == len(layer_sizes) - 1
        assert jnp.allclose(logits, ref_logits, atol=1e-5), "logits mismatch"
        assert jnp.allclose(probs, ref_probs, atol=1e-5), "softmax mismatch"
        for got, want in zip(acts[:-1], ref_hidden):
            assert jnp.allclose(got, want, atol=1e-5), "hidden activation mismatch"
        assert jnp.allclose(jnp.sum(probs, axis=-1), 1.0, atol=1e-5)

    key, k1, k2 = jax.random.split(key, 3)
    check(8, k1)     # single-tile path (tiny batch)
    check(300, k2)   # multi-tile grid path (2 x 256-row tiles, padded batch)

    print("KERNEL_OK")
</pallas_src>

<mosaic_0001>
module attributes {stable_mosaic.version = 11 : i64} {
  func.func @_fused_fnn_kernel(%arg0: i32, %arg1: memref<8x128xf32, #tpu.memory_space<vmem>>, %arg2: memref<128x128xf32, #tpu.memory_space<vmem>>, %arg3: memref<1x128xf32, #tpu.memory_space<vmem>>, %arg4: memref<128x128xf32, #tpu.memory_space<vmem>>, %arg5: memref<1x128xf32, #tpu.memory_space<vmem>>, %arg6: memref<128x128xf32, #tpu.memory_space<vmem>>, %arg7: memref<1x128xf32, #tpu.memory_space<vmem>>, %arg8: memref<8x128xf32, #tpu.memory_space<vmem>>, %arg9: memref<8x128xf32, #tpu.memory_space<vmem>>, %arg10: memref<8x128xf32, #tpu.memory_space<vmem>>, %arg11: memref<8x128xf32, #tpu.memory_space<vmem>>) attributes {dimension_semantics = [#tpu.dimension_semantics<parallel>], iteration_bounds = array<i64: 1>, scalar_prefetch = 0 : i64, scratch_operands = 0 : i64, tpu.core_type = #tpu.core_type<tc>, window_params = [{transform_indices = @transform_0, window_bounds = array<i64: 8, 128>}, {pipeline_mode = #tpu.pipeline_mode<synchronous>, transform_indices = @transform_1, window_bounds = array<i64: 128, 128>}, {pipeline_mode = #tpu.pipeline_mode<synchronous>, transform_indices = @transform_2, window_bounds = array<i64: 1, 128>}, {pipeline_mode = #tpu.pipeline_mode<synchronous>, transform_indices = @transform_3, window_bounds = array<i64: 128, 128>}, {pipeline_mode = #tpu.pipeline_mode<synchronous>, transform_indices = @transform_4, window_bounds = array<i64: 1, 128>}, {pipeline_mode = #tpu.pipeline_mode<synchronous>, transform_indices = @transform_5, window_bounds = array<i64: 128, 128>}, {pipeline_mode = #tpu.pipeline_mode<synchronous>, transform_indices = @transform_6, window_bounds = array<i64: 1, 128>}, {transform_indices = @transform_7, window_bounds = array<i64: 8, 128>}, {transform_indices = @transform_8, window_bounds = array<i64: 8, 128>}, {transform_indices = @transform_9, window_bounds = array<i64: 8, 128>}, {transform_indices = @transform_10, window_bounds = array<i64: 8, 128>}]} {
    %c0 = arith.constant 0 : index
    %c0_0 = arith.constant 0 : index
    %0 = vector.load %arg1[%c0, %c0_0] : memref<8x128xf32, #tpu.memory_space<vmem>>, vector<8x128xf32>
    %c0_1 = arith.constant 0 : index
    %c0_2 = arith.constant 0 : index
    %1 = vector.load %arg2[%c0_1, %c0_2] : memref<128x128xf32, #tpu.memory_space<vmem>>, vector<128x128xf32>
    %c0_3 = arith.constant 0 : index
    %c0_4 = arith.constant 0 : index
    %2 = vector.load %arg3[%c0_3, %c0_4] : memref<1x128xf32, #tpu.memory_space<vmem>>, vector<1x128xf32>
    %cst = arith.constant dense<0.000000e+00> : vector<8x128xf32>
    %3 = tpu.matmul %0, %1, %cst {dimension_numbers = #tpu.dot_dimension_numbers<[1], [0], [0], [1], [0, 0, 1, 1], [], []>} : vector<8x128xf32>, vector<128x128xf32>, vector<8x128xf32> -> vector<8x128xf32>
    %4 = vector.broadcast %2 : vector<1x128xf32> to vector<8x128xf32>
    %5 = arith.addf %3, %4 : vector<8x128xf32>
    %6 = math.tanh %5 : vector<8x128xf32>
    %c0_5 = arith.constant 0 : index
    %c0_6 = arith.constant 0 : index
    %7 = vector.load %arg10[%c0_5, %c0_6] : memref<8x128xf32, #tpu.memory_space<vmem>>, vector<8x128xf32>
    tpu.vector_store %arg10[%c0_5, %c0_6], %6 {strides = array<i32>} : memref<8x128xf32, #tpu.memory_space<vmem>>, vector<8x128xf32>,
    %c0_7 = arith.constant 0 : index
    %c0_8 = arith.constant 0 : index
    %8 = vector.load %arg4[%c0_7, %c0_8] : memref<128x128xf32, #tpu.memory_space<vmem>>, vector<128x128xf32>
    %c0_9 = arith.constant 0 : index
    %c0_10 = arith.constant 0 : index
    %9 = vector.load %arg5[%c0_9, %c0_10] : memref<1x128xf32, #tpu.memory_space<vmem>>, vector<1x128xf32>
    %cst_11 = arith.constant dense<0.000000e+00> : vector<8x128xf32>
    %10 = tpu.matmul %6, %8, %cst_11 {dimension_numbers = #tpu.dot_dimension_numbers<[1], [0], [0], [1], [0, 0, 1, 1], [], []>} : vector<8x128xf32>, vector<128x128xf32>, vector<8x128xf32> -> vector<8x128xf32>
    %11 = vector.broadcast %9 : vector<1x128xf32> to vector<8x128xf32>
    %12 = arith.addf %10, %11 : vector<8x128xf32>
    %13 = math.tanh %12 : vector<8x128xf32>
    %c0_12 = arith.constant 0 : index
    %c0_13 = arith.constant 0 : index
    %14 = vector.load %arg11[%c0_12, %c0_13] : memref<8x128xf32, #tpu.memory_space<vmem>>, vector<8x128xf32>
    tpu.vector_store %arg11[%c0_12, %c0_13], %13 {strides = array<i32>} : memref<8x128xf32, #tpu.memory_space<vmem>>, vector<8x128xf32>,
    %c0_14 = arith.constant 0 : index
    %c0_15 = arith.constant 0 : index
    %15 = vector.load %arg6[%c0_14, %c0_15] : memref<128x128xf32, #tpu.memory_space<vmem>>, vector<128x128xf32>
    %c0_16 = arith.constant 0 : index
    %c0_17 = arith.constant 0 : index
    %16 = vector.load %arg7[%c0_16, %c0_17] : memref<1x128xf32, #tpu.memory_space<vmem>>, vector<1x128xf32>
    %cst_18 = arith.constant dense<0.000000e+00> : vector<8x128xf32>
    %17 = tpu.matmul %13, %15, %cst_18 {dimension_numbers = #tpu.dot_dimension_numbers<[1], [0], [0], [1], [0, 0, 1, 1], [], []>} : vector<8x128xf32>, vector<128x128xf32>, vector<8x128xf32> -> vector<8x128xf32>
    %18 = vector.broadcast %16 : vector<1x128xf32> to vector<8x128xf32>
    %19 = arith.addf %17, %18 : vector<8x128xf32>
    %cst_19 = arith.constant dense<0xFF800000> : vector<8xf32>
    %20 = vector.multi_reduction <maximumf>, %19, %cst_19 [1] : vector<8x128xf32> to vector<8xf32>
    %21 = vector.shape_cast %20 : vector<8xf32> to vector<8x1xf32>
    %22 = vector.broadcast %21 : vector<8x1xf32> to vector<8x128xf32>
    %23 = arith.subf %19, %22 : vector<8x128xf32>
    %24 = math.exp %23 : vector<8x128xf32>
    %cst_20 = arith.constant dense<0.000000e+00> : vector<8xf32>
    %25 = vector.multi_reduction <add>, %24, %cst_20 [1] : vector<8x128xf32> to vector<8xf32>
    %26 = vector.shape_cast %25 : vector<8xf32> to vector<8x1xf32>
    %27 = tpu.reciprocal %26 {approx = true} : vector<8x1xf32> -> vector<8x1xf32>
    %28 = arith.mulf %26, %27 : vector<8x1xf32>
    %cst_21 = arith.constant 2.000000e+00 : f32
    %29 = vector.broadcast %cst_21 : f32 to vector<8x1xf32>
    %30 = arith.subf %29, %28 : vector<8x1xf32>
    %31 = arith.mulf %27, %30 : vector<8x1xf32>
    %32 = vector.broadcast %31 : vector<8x1xf32> to vector<8x128xf32>
    %33 = arith.mulf %24, %32 : vector<8x128xf32>
    %c0_22 = arith.constant 0 : index
    %c0_23 = arith.constant 0 : index
    %34 = vector.load %arg8[%c0_22, %c0_23] : memref<8x128xf32, #tpu.memory_space<vmem>>, vector<8x128xf32>
    tpu.vector_store %arg8[%c0_22, %c0_23], %19 {strides = array<i32>} : memref<8x128xf32, #tpu.memory_space<vmem>>, vector<8x128xf32>,
    %c0_24 = arith.constant 0 : index
    %c0_25 = arith.constant 0 : index
    %35 = vector.load %arg9[%c0_24, %c0_25] : memref<8x128xf32, #tpu.memory_space<vmem>>, vector<8x128xf32>
    tpu.vector_store %arg9[%c0_24, %c0_25], %33 {strides = array<i32>} : memref<8x128xf32, #tpu.memory_space<vmem>>, vector<8x128xf32>,
    return
  }
  func.func @transform_0(%arg0: i32) -> (i32, i32) {
    %c0_i32 = arith.constant 0 : i32
    %c0_i32_0 = arith.constant 0 : i32
    return %arg0, %c0_i32 : i32, i32
  }
  func.func @transform_1(%arg0: i32) -> (i32, i32) {
    %c0_i32 = arith.constant 0 : i32
    %c0_i32_0 = arith.constant 0 : i32
    %c0_i32_1 = arith.constant 0 : i32
    return %c0_i32, %c0_i32_0 : i32, i32
  }
  func.func @transform_2(%arg0: i32) -> (i32, i32) {
    %c0_i32 = arith.constant 0 : i32
    %c0_i32_0 = arith.constant 0 : i32
    %c0_i32_1 = arith.constant 0 : i32
    return %c0_i32, %c0_i32_0 : i32, i32
  }
  func.func @transform_3(%arg0: i32) -> (i32, i32) {
    %c0_i32 = arith.constant 0 : i32
    %c0_i32_0 = arith.constant 0 : i32
    %c0_i32_1 = arith.constant 0 : i32
    return %c0_i32, %c0_i32_0 : i32, i32
  }
  func.func @transform_4(%arg0: i32) -> (i32, i32) {
    %c0_i32 = arith.constant 0 : i32
    %c0_i32_0 = arith.constant 0 : i32
    %c0_i32_1 = arith.constant 0 : i32
    return %c0_i32, %c0_i32_0 : i32, i32
  }
  func.func @transform_5(%arg0: i32) -> (i32, i32) {
    %c0_i32 = arith.constant 0 : i32
    %c0_i32_0 = arith.constant 0 : i32
    %c0_i32_1 = arith.constant 0 : i32
    return %c0_i32, %c0_i32_0 : i32, i32
  }
  func.func @transform_6(%arg0: i32) -> (i32, i32) {
    %c0_i32 = arith.constant 0 : i32
    %c0_i32_0 = arith.constant 0 : i32
    %c0_i32_1 = arith.constant 0 : i32
    return %c0_i32, %c0_i32_0 : i32, i32
  }
  func.func @transform_7(%arg0: i32) -> (i32, i32) {
    %c0_i32 = arith.constant 0 : i32
    %c0_i32_0 = arith.constant 0 : i32
    return %arg0, %c0_i32 : i32, i32
  }
  func.func @transform_8(%arg0: i32) -> (i32, i32) {
    %c0_i32 = arith.constant 0 : i32
    %c0_i32_0 = arith.constant 0 : i32
    return %arg0, %c0_i32 : i32, i32
  }
  func.func @transform_9(%arg0: i32) -> (i32, i32) {
    %c0_i32 = arith.constant 0 : i32
    %c0_i32_0 = arith.constant 0 : i32
    return %arg0, %c0_i32 : i32, i32
  }
  func.func @transform_10(%arg0: i32) -> (i32, i32) {
    %c0_i32 = arith.constant 0 : i32
    %c0_i32_0 = arith.constant 0 : i32
    return %arg0, %c0_i32 : i32, i32
  }
}

</mosaic_0001>

<llo_original>
// kernel: tpu_custom_call.1
$region0: #{tpu_custom_call.1}
  #allocation0 [shape = 'u32[]', space=smem, size = 0x4, offset = 0x4, fixed_abs, tag = 'smem constant byte address 0x4 - core index']
  #allocation1 [shape = 'u32[144,128]{1,0:T(1,128)}', space=vmem, size = 0x12000, scoped, tag = 'internal scratch']
  %s0 = inlined_call_operand.hbm [shape: f32[8,128], index: 0, kind: input, shape index: {}]
  %s1 = inlined_call_operand.hbm [shape: f32[128,128], index: 1, kind: input, shape index: {}]
  %s2 = inlined_call_operand.vmem [shape: f32[1,128], index: 2, kind: input, shape index: {}]
  %s3 = inlined_call_operand.hbm [shape: f32[128,128], index: 3, kind: input, shape index: {}]
  %s4 = inlined_call_operand.vmem [shape: f32[1,128], index: 4, kind: input, shape index: {}]
  %s5 = inlined_call_operand.hbm [shape: f32[128,128], index: 5, kind: input, shape index: {}]
  %s6 = inlined_call_operand.vmem [shape: f32[1,128], index: 6, kind: input, shape index: {}]
  %s7 = inlined_call_operand.hbm [shape: f32[8,128], index: 7, kind: output, shape index: {0}]
  %s8 = inlined_call_operand.hbm [shape: f32[8,128], index: 8, kind: output, shape index: {1}]
  %s9 = inlined_call_operand.hbm [shape: f32[8,128], index: 9, kind: output, shape index: {2}]
  %s10 = inlined_call_operand.hbm [shape: f32[8,128], index: 10, kind: output, shape index: {3}]
  %11 = xla_tuple %s7, %s8, %s9, %s10
  %s12 = sld [smem:[#allocation0]]
  $region78: #{tpu_custom_call.1} parent=0
    _
  %s14 = ssub.s32 1, %s12
  %s15 = scalar_select 0, %s14, %s12
  $region1: #{tpu_custom_call.1} parent=0
    #allocation2 [shape = 'u8[4096]{0}', space=vmem, size = 0x1000, scoped, tag = 'input window, operand 0, single buffered']
    #allocation3 [shape = 's32[1]{0}', space=sflag, size = 0x4, scoped, tag = 'scoped memory for tpu_custom_call.1']
    #allocation4 [shape = 's32[1]{0}', space=sflag, size = 0x4, scoped, tag = 'scoped memory for tpu_custom_call.1']
    #allocation5 [shape = 'u8[65536]{0}', space=vmem, size = 0x10000, scoped, tag = 'input window, operand 1, single buffered']
    #allocation6 [shape = 's32[1]{0}', space=sflag, size = 0x4, scoped, tag = 'scoped memory for tpu_custom_call.1']
    #allocation7 [shape = 'u8[65536]{0}', space=vmem, size = 0x10000, scoped, tag = 'input window, operand 3, single buffered']
    #allocation8 [shape = 'u8[65536]{0}', space=vmem, size = 0x10000, scoped, tag = 'input window, operand 5, single buffered']
    #allocation9 [shape = 's32[1]{0}', space=sflag, size = 0x4, scoped, tag = 'scoped memory for tpu_custom_call.1']
    #allocation10 [shape = 'u8[4096]{0}', space=vmem, size = 0x1000, scoped, tag = 'output window, operand 0, single buffered']
    #allocation11 [shape = 'u8[4096]{0}', space=vmem, size = 0x1000, scoped, tag = 'output window, operand 1, single buffered']
    #allocation12 [shape = 's32[1]{0}', space=sflag, size = 0x4, scoped, tag = 'scoped memory for tpu_custom_call.1']
    #allocation13 [shape = 'u8[4096]{0}', space=vmem, size = 0x1000, scoped, tag = 'output window, operand 2, single buffered']
    #allocation14 [shape = 'u8[4096]{0}', space=vmem, size = 0x1000, scoped, tag = 'output window, operand 3, single buffered']
    #allocation15 [shape = 's32[1]{0}', space=sflag, size = 0x4, scoped, tag = 'scoped memory for tpu_custom_call.1']
    %16 = vsyncpa [#allocation3], 0
    %17 = vsyncpa [#allocation6], 0
    %18 = vsyncpa [#allocation9], 0
    %19 = vsyncpa [#allocation4], 0
    %20 = vsyncpa [#allocation12], 0
    %21 = vsyncpa [#allocation15], 0
    // Predicated region
    $region2: #{tpu_custom_call.1} parent=1 // pred_check
      _
    $region3: #{tpu_custom_call.1} parent=1 // pred_check_branch
      %23 = sbr.rel (0) target = $region5
    $region4: #{tpu_custom_call.1} parent=1 // pred_region
      %s25 = ssub.s32 128, 128
      %26 = vsyncadd [#allocation3], %s25
      %s28 = sshll.u32 [#allocation2], 4
      %s29 = int_to_ptr.vmem [resolvable:$true] %s28
      %31 = dma.hbm_to_vmem [thread:$0]  %s0, 128, %s29, [#allocation3]
    $region5: #{tpu_custom_call.1} parent=1 // pred_fallthru
      _
    // Predicated region
    $region6: #{tpu_custom_call.1} parent=1 // pred_check
      _
    $region7: #{tpu_custom_call.1} parent=1 // pred_check_branch
      %33 = sbr.rel (0) target = $region9
    $region8: #{tpu_custom_call.1} parent=1 // pred_region
      %s35 = ssub.s32 2048, 2048
      %36 = vsyncadd [#allocation6], %s35
      %s37 = sshll.u32 [#allocation5], 4
      %s38 = int_to_ptr.vmem [resolvable:$true] %s37
      %43 = dma.hbm_to_vmem [thread:$0]  %s1, 2048, %s38, [#allocation6], 128, 128, 8
    $region9: #{tpu_custom_call.1} parent=1 // pred_fallthru
      _
    // Predicated region
    $region10: #{tpu_custom_call.1} parent=1 // pred_check
      _
    $region11: #{tpu_custom_call.1} parent=1 // pred_check_branch
      %45 = sbr.rel (0) target = $region13
    $region12: #{tpu_custom_call.1} parent=1 // pred_region
      _
    $region13: #{tpu_custom_call.1} parent=1 // pred_fallthru
      _
    // Predicated region
    $region14: #{tpu_custom_call.1} parent=1 // pred_check
      _
    $region15: #{tpu_custom_call.1} parent=1 // pred_check_branch
      %47 = sbr.rel (0) target = $region17
    $region16: #{tpu_custom_call.1} parent=1 // pred_region
      %s49 = ssub.s32 2048, 2048
      %50 = vsyncadd [#allocation6], %s49
      %s51 = sshll.u32 [#allocation7], 4
      %s52 = int_to_ptr.vmem [resolvable:$true] %s51
      %57 = dma.hbm_to_vmem [thread:$0]  %s3, 2048, %s52, [#allocation6], 128, 128, 8
    $region17: #{tpu_custom_call.1} parent=1 // pred_fallthru
      _
    // Predicated region
    $region18: #{tpu_custom_call.1} parent=1 // pred_check
      _
    $region19: #{tpu_custom_call.1} parent=1 // pred_check_branch
      %59 = sbr.rel (0) target = $region21
    $region20: #{tpu_custom_call.1} parent=1 // pred_region
      _
    $region21: #{tpu_custom_call.1} parent=1 // pred_fallthru
      _
    // Predicated region
    $region22: #{tpu_custom_call.1} parent=1 // pred_check
      _
    $region23: #{tpu_custom_call.1} parent=1 // pred_check_branch
      %61 = sbr.rel (0) target = $region25
    $region24: #{tpu_custom_call.1} parent=1 // pred_region
      %s63 = ssub.s32 2048, 2048
      %64 = vsyncadd [#allocation9], %s63
      %s65 = sshll.u32 [#allocation8], 4
      %s66 = int_to_ptr.vmem [resolvable:$true] %s65
      %71 = dma.hbm_to_vmem [thread:$0]  %s5, 2048, %s66, [#allocation9], 128, 128, 8
    $region25: #{tpu_custom_call.1} parent=1 // pred_fallthru
      _
    // Predicated region
    $region26: #{tpu_custom_call.1} parent=1 // pred_check
      _
    $region27: #{tpu_custom_call.1} parent=1 // pred_check_branch
      %73 = sbr.rel (0) target = $region29
    $region28: #{tpu_custom_call.1} parent=1 // pred_region
      _
    $region29: #{tpu_custom_call.1} parent=1 // pred_fallthru
      _
    // Predicated region
    $region30: #{tpu_custom_call.1} parent=1 // pred_check
      _
    $region31: #{tpu_custom_call.1} parent=1 // pred_check_branch
      %75 = sbr.rel (0) target = $region33
    $region32: #{tpu_custom_call.1} parent=1 // pred_region
      %76 = dma.done [#allocation3], 128
    $region33: #{tpu_custom_call.1} parent=1 // pred_fallthru
      _
    // Predicated region
    $region34: #{tpu_custom_call.1} parent=1 // pred_check
      _
    $region35: #{tpu_custom_call.1} parent=1 // pred_check_branch
      %78 = sbr.rel (0) target = $region37
    $region36: #{tpu_custom_call.1} parent=1 // pred_region
      %79 = dma.done [#allocation6], 2048
    $region37: #{tpu_custom_call.1} parent=1 // pred_fallthru
      _
    // Predicated region
    $region38: #{tpu_custom_call.1} parent=1 // pred_check
      _
    $region39: #{tpu_custom_call.1} parent=1 // pred_check_branch
      %81 = sbr.rel (0) target = $region41
    $region40: #{tpu_custom_call.1} parent=1 // pred_region
      %82 = dma.done [#allocation6], 2048
    $region41: #{tpu_custom_call.1} parent=1 // pred_fallthru
      _
    // Predicated region
    $region42: #{tpu_custom_call.1} parent=1 // pred_check
      _
    $region43: #{tpu_custom_call.1} parent=1 // pred_check_branch
      %84 = sbr.rel (0) target = $region45
    $region44: #{tpu_custom_call.1} parent=1 // pred_region
      %85 = dma.done [#allocation9], 2048
    $region45: #{tpu_custom_call.1} parent=1 // pred_fallthru
      _
    %v86 = vld [vmem:[#allocation2] sm:$0xff]
    %v87 = vld [vmem:[#allocation5] sm:$0xff]
    %v88 = vld [vmem:[#allocation5 + $0x8] sm:$0xff]
    %v89 = vld [vmem:[#allocation5 + $0x10] sm:$0xff]
    %v90 = vld [vmem:[#allocation5 + $0x18] sm:$0xff]
    %v91 = vld [vmem:[#allocation5 + $0x20] sm:$0xff]
    %v92 = vld [vmem:[#allocation5 + $0x28] sm:$0xff]
    %v93 = vld [vmem:[#allocation5 + $0x30] sm:$0xff]
    %v94 = vld [vmem:[#allocation5 + $0x38] sm:$0xff]
    %v95 = vld [vmem:[#allocation5 + $0x40] sm:$0xff]
    %v96 = vld [vmem:[#allocation5 + $0x48] sm:$0xff]
    %v97 = vld [vmem:[#allocation5 + $0x50] sm:$0xff]
    %v98 = vld [vmem:[#allocation5 + $0x58] sm:$0xff]
    %v99 = vld [vmem:[#allocation5 + $0x60] sm:$0xff]
    %v100 = vld [vmem:[#allocation5 + $0x68] sm:$0xff]
    %v101 = vld [vmem:[#allocation5 + $0x70] sm:$0xff]
    %v102 = vld [vmem:[#allocation5 + $0x78] sm:$0xff]
    %v103 = vld [vmem:[%s2] sm:$0x1]
    %v105 = vlaneseq
    %v106 = vshrl.u32 %v105, 7
    %v107 = vsub.s32 0, %v106
    %v108 = vrot.slane %v103, %v107
    %110 = vmatprep.subr.mxu0 0.0
    %111 = vmatpush1.msra.mxu0 %v87
    %112 = vmatprep.subr.mxu0 0.0
    %113 = vmatpush1.msra.mxu0 %v88
    %114 = vmatprep.subr.mxu0 0.0
    %115 = vmatpush1.msra.mxu0 %v89
    %116 = vmatprep.subr.mxu0 0.0
    %117 = vmatpush1.msra.mxu0 %v90
    %118 = vmatprep.subr.mxu0 0.0
    %119 = vmatpush1.msra.mxu0 %v91
    %120 = vmatprep.subr.mxu0 0.0
    %121 = vmatpush1.msra.mxu0 %v92
    %122 = vmatprep.subr.mxu0 0.0
    %123 = vmatpush1.msra.mxu0 %v93
    %124 = vmatprep.subr.mxu0 0.0
    %125 = vmatpush1.msra.mxu0 %v94
    %126 = vmatprep.subr.mxu0 0.0
    %127 = vmatpush1.msra.mxu0 %v95
    %128 = vmatprep.subr.mxu0 0.0
    %129 = vmatpush1.msra.mxu0 %v96
    %130 = vmatprep.subr.mxu0 0.0
    %131 = vmatpush1.msra.mxu0 %v97
    %132 = vmatprep.subr.mxu0 0.0
    %133 = vmatpush1.msra.mxu0 %v98
    %134 = vmatprep.subr.mxu0 0.0
    %135 = vmatpush1.msra.mxu0 %v99
    %136 = vmatprep.subr.mxu0 0.0
    %137 = vmatpush1.msra.mxu0 %v100
    %138 = vmatprep.subr.mxu0 0.0
    %139 = vmatpush1.msra.mxu0 %v101
    %140 = vmatprep.subr.mxu0 0.0
    %141 = vmatpush1.msra.mxu0 %v102
    %142 = vmatprep.subr.mxu0 0.0
    %143 = vmatpush1.msra.mxu0 0.0
    %144 = vmatprep.subr.mxu0 0.0
    %145 = vmatpush1.msra.mxu0 0.0
    %146 = vmatprep.subr.mxu0 0.0
    %147 = vmatpush1.msra.mxu0 0.0
    %148 = vmatprep.subr.mxu0 0.0
    %149 = vmatpush1.msra.mxu0 0.0
    %150 = vmatprep.subr.mxu0 0.0
    %151 = vmatpush1.msra.mxu0 0.0
    %152 = vmatprep.subr.mxu0 0.0
    %153 = vmatpush1.msra.mxu0 0.0
    %154 = vmatprep.subr.mxu0 0.0
    %155 = vmatpush1.msra.mxu0 0.0
    %156 = vmatprep.subr.mxu0 0.0
    %157 = vmatpush1.msra.mxu0 0.0
    %158 = vmatprep.subr.mxu0 0.0
    %159 = vmatpush1.msra.mxu0 0.0
    %160 = vmatprep.subr.mxu0 0.0
    %161 = vmatpush1.msra.mxu0 0.0
    %162 = vmatprep.subr.mxu0 0.0
    %163 = vmatpush1.msra.mxu0 0.0
    %164 = vmatprep.subr.mxu0 0.0
    %165 = vmatpush1.msra.mxu0 0.0
    %166 = vmatprep.subr.mxu0 0.0
    %167 = vmatpush1.msra.mxu0 0.0
    %168 = vmatprep.subr.mxu0 0.0
    %169 = vmatpush1.msra.mxu0 0.0
    %170 = vmatprep.subr.mxu0 0.0
    %171 = vmatpush1.msra.mxu0 0.0
    %172 = vmatprep.subr.mxu0 0.0
    %173 = vmatpush1.msra.mxu0 0.0
    %174 = vmatprep.mubr.f32.mxu0 0.0
    %175 = vmatmul.mubr.f32.gmra.mrb[0].mxu0 %v86
    %v176 = vpop.f32.mrb[0].mxu0
    %v177 = vadd.f32 %v108, %v176
    %v178 = vpop.f32.mrb[0].mxu0
    %179 = vdwg.mxu0
    %v180 = vtanh.pop %v177
    %181 = vst [vmem:[#allocation13] sm:$0xff] %v180
    %v182 = vld [vmem:[#allocation7] sm:$0xff]
    %v183 = vld [vmem:[#allocation7 + $0x8] sm:$0xff]
    %v184 = vld [vmem:[#allocation7 + $0x10] sm:$0xff]
    %v185 = vld [vmem:[#allocation7 + $0x18] sm:$0xff]
    %v186 = vld [vmem:[#allocation7 + $0x20] sm:$0xff]
    %v187 = vld [vmem:[#allocation7 + $0x28] sm:$0xff]
    %v188 = vld [vmem:[#allocation7 + $0x30] sm:$0xff]
    %v189 = vld [vmem:[#allocation7 + $0x38] sm:$0xff]
    %v190 = vld [vmem:[#allocation7 + $0x40] sm:$0xff]
    %v191 = vld [vmem:[#allocation7 + $0x48] sm:$0xff]
    %v192 = vld [vmem:[#allocation7 + $0x50] sm:$0xff]
    %v193 = vld [vmem:[#allocation7 + $0x58] sm:$0xff]
    %v194 = vld [vmem:[#allocation7 + $0x60] sm:$0xff]
    %v195 = vld [vmem:[#allocation7 + $0x68] sm:$0xff]
    %v196 = vld [vmem:[#allocation7 + $0x70] sm:$0xff]
    %v197 = vld [vmem:[#allocation7 + $0x78] sm:$0xff]
    %v198 = vld [vmem:[%s4] sm:$0x1]
    %v200 = vlaneseq
    %v201 = vshrl.u32 %v200, 7
    %v202 = vsub.s32 0, %v201
    %v203 = vrot.slane %v198, %v202
    %205 = vmatprep.subr.mxu0 0.0
    %206 = vmatpush1.msra.mxu0 %v182
    %207 = vmatprep.subr.mxu0 0.0
    %208 = vmatpush1.msra.mxu0 %v183
    %209 = vmatprep.subr.mxu0 0.0
    %210 = vmatpush1.msra.mxu0 %v184
    %211 = vmatprep.subr.mxu0 0.0
    %212 = vmatpush1.msra.mxu0 %v185
    %213 = vmatprep.subr.mxu0 0.0
    %214 = vmatpush1.msra.mxu0 %v186
    %215 = vmatprep.subr.mxu0 0.0
    %216 = vmatpush1.msra.mxu0 %v187
    %217 = vmatprep.subr.mxu0 0.0
    %218 = vmatpush1.msra.mxu0 %v188
    %219 = vmatprep.subr.mxu0 0.0
    %220 = vmatpush1.msra.mxu0 %v189
    %221 = vmatprep.subr.mxu0 0.0
    %222 = vmatpush1.msra.mxu0 %v190
    %223 = vmatprep.subr.mxu0 0.0
    %224 = vmatpush1.msra.mxu0 %v191
    %225 = vmatprep.subr.mxu0 0.0
    %226 = vmatpush1.msra.mxu0 %v192
    %227 = vmatprep.subr.mxu0 0.0
    %228 = vmatpush1.msra.mxu0 %v193
    %229 = vmatprep.subr.mxu0 0.0
    %230 = vmatpush1.msra.mxu0 %v194
    %231 = vmatprep.subr.mxu0 0.0
    %232 = vmatpush1.msra.mxu0 %v195
    %233 = vmatprep.subr.mxu0 0.0
    %234 = vmatpush1.msra.mxu0 %v196
    %235 = vmatprep.subr.mxu0 0.0
    %236 = vmatpush1.msra.mxu0 %v197
    %237 = vmatprep.subr.mxu0 0.0
    %238 = vmatpush1.msra.mxu0 0.0
    %239 = vmatprep.subr.mxu0 0.0
    %240 = vmatpush1.msra.mxu0 0.0
    %241 = vmatprep.subr.mxu0 0.0
    %242 = vmatpush1.msra.mxu0 0.0
    %243 = vmatprep.subr.mxu0 0.0
    %244 = vmatpush1.msra.mxu0 0.0
    %245 = vmatprep.subr.mxu0 0.0
    %246 = vmatpush1.msra.mxu0 0.0
    %247 = vmatprep.subr.mxu0 0.0
    %248 = vmatpush1.msra.mxu0 0.0
    %249 = vmatprep.subr.mxu0 0.0
    %250 = vmatpush1.msra.mxu0 0.0
    %251 = vmatprep.subr.mxu0 0.0
    %252 = vmatpush1.msra.mxu0 0.0
    %253 = vmatprep.subr.mxu0 0.0
    %254 = vmatpush1.msra.mxu0 0.0
    %255 = vmatprep.subr.mxu0 0.0
    %256 = vmatpush1.msra.mxu0 0.0
    %257 = vmatprep.subr.mxu0 0.0
    %258 = vmatpush1.msra.mxu0 0.0
    %259 = vmatprep.subr.mxu0 0.0
    %260 = vmatpush1.msra.mxu0 0.0
    %261 = vmatprep.subr.mxu0 0.0
    %262 = vmatpush1.msra.mxu0 0.0
    %263 = vmatprep.subr.mxu0 0.0
    %264 = vmatpush1.msra.mxu0 0.0
    %265 = vmatprep.subr.mxu0 0.0
    %266 = vmatpush1.msra.mxu0 0.0
    %267 = vmatprep.subr.mxu0 0.0
    %268 = vmatpush1.msra.mxu0 0.0
    %269 = vmatprep.mubr.f32.mxu0 0.0
    %270 = vmatmul.mubr.f32.gmra.mrb[0].mxu0 %v180
    %v271 = vpop.f32.mrb[0].mxu0
    %v272 = vadd.f32 %v203, %v271
    %v273 = vpop.f32.mrb[0].mxu0
    %274 = vdwg.mxu0
    %v275 = vtanh.pop %v272
    %276 = vst [vmem:[#allocation14] sm:$0xff] %v275
    %v277 = vld [vmem:[#allocation8] sm:$0xff]
    %v278 = vld [vmem:[#allocation8 + $0x8] sm:$0xff]
    %v279 = vld [vmem:[#allocation8 + $0x10] sm:$0xff]
    %v280 = vld [vmem:[#allocation8 + $0x18] sm:$0xff]
    %v281 = vld [vmem:[#allocation8 + $0x20] sm:$0xff]
    %v282 = vld [vmem:[#allocation8 + $0x28] sm:$0xff]
    %v283 = vld [vmem:[#allocation8 + $0x30] sm:$0xff]
    %v284 = vld [vmem:[#allocation8 + $0x38] sm:$0xff]
    %v285 = vld [vmem:[#allocation8 + $0x40] sm:$0xff]
    %v286 = vld [vmem:[#allocation8 + $0x48] sm:$0xff]
    %v287 = vld [vmem:[#allocation8 + $0x50] sm:$0xff]
    %v288 = vld [vmem:[#allocation8 + $0x58] sm:$0xff]
    %v289 = vld [vmem:[#allocation8 + $0x60] sm:$0xff]
    %v290 = vld [vmem:[#allocation8 + $0x68] sm:$0xff]
    %v291 = vld [vmem:[#allocation8 + $0x70] sm:$0xff]
    %v292 = vld [vmem:[#allocation8 + $0x78] sm:$0xff]
    %v293 = vld [vmem:[%s6] sm:$0x1]
    %v295 = vlaneseq
    %v296 = vshrl.u32 %v295, 7
    %v297 = vsub.s32 0, %v296
    %v298 = vrot.slane %v293, %v297
    %300 = vmatprep.subr.mxu0 0.0
    %301 = vmatpush1.msra.mxu0 %v277
    %302 = vmatprep.subr.mxu0 0.0
    %303 = vmatpush1.msra.mxu0 %v278
    %304 = vmatprep.subr.mxu0 0.0
    %305 = vmatpush1.msra.mxu0 %v279
    %306 = vmatprep.subr.mxu0 0.0
    %307 = vmatpush1.msra.mxu0 %v280
    %308 = vmatprep.subr.mxu0 0.0
    %309 = vmatpush1.msra.mxu0 %v281
    %310 = vmatprep.subr.mxu0 0.0
    %311 = vmatpush1.msra.mxu0 %v282
    %312 = vmatprep.subr.mxu0 0.0
    %313 = vmatpush1.msra.mxu0 %v283
    %314 = vmatprep.subr.mxu0 0.0
    %315 = vmatpush1.msra.mxu0 %v284
    %316 = vmatprep.subr.mxu0 0.0
    %317 = vmatpush1.msra.mxu0 %v285
    %318 = vmatprep.subr.mxu0 0.0
    %319 = vmatpush1.msra.mxu0 %v286
    %320 = vmatprep.subr.mxu0 0.0
    %321 = vmatpush1.msra.mxu0 %v287
    %322 = vmatprep.subr.mxu0 0.0
    %323 = vmatpush1.msra.mxu0 %v288
    %324 = vmatprep.subr.mxu0 0.0
    %325 = vmatpush1.msra.mxu0 %v289
    %326 = vmatprep.subr.mxu0 0.0
    %327 = vmatpush1.msra.mxu0 %v290
    %328 = vmatprep.subr.mxu0 0.0
    %329 = vmatpush1.msra.mxu0 %v291
    %330 = vmatprep.subr.mxu0 0.0
    %331 = vmatpush1.msra.mxu0 %v292
    %332 = vmatprep.subr.mxu0 0.0
    %333 = vmatpush1.msra.mxu0 0.0
    %334 = vmatprep.subr.mxu0 0.0
    %335 = vmatpush1.msra.mxu0 0.0
    %336 = vmatprep.subr.mxu0 0.0
    %337 = vmatpush1.msra.mxu0 0.0
    %338 = vmatprep.subr.mxu0 0.0
    %339 = vmatpush1.msra.mxu0 0.0
    %340 = vmatprep.subr.mxu0 0.0
    %341 = vmatpush1.msra.mxu0 0.0
    %342 = vmatprep.subr.mxu0 0.0
    %343 = vmatpush1.msra.mxu0 0.0
    %344 = vmatprep.subr.mxu0 0.0
    %345 = vmatpush1.msra.mxu0 0.0
    %346 = vmatprep.subr.mxu0 0.0
    %347 = vmatpush1.msra.mxu0 0.0
    %348 = vmatprep.subr.mxu0 0.0
    %349 = vmatpush1.msra.mxu0 0.0
    %350 = vmatprep.subr.mxu0 0.0
    %351 = vmatpush1.msra.mxu0 0.0
    %352 = vmatprep.subr.mxu0 0.0
    %353 = vmatpush1.msra.mxu0 0.0
    %354 = vmatprep.subr.mxu0 0.0
    %355 = vmatpush1.msra.mxu0 0.0
    %356 = vmatprep.subr.mxu0 0.0
    %357 = vmatpush1.msra.mxu0 0.0
    %358 = vmatprep.subr.mxu0 0.0
    %359 = vmatpush1.msra.mxu0 0.0
    %360 = vmatprep.subr.mxu0 0.0
    %361 = vmatpush1.msra.mxu0 0.0
    %362 = vmatprep.subr.mxu0 0.0
    %363 = vmatpush1.msra.mxu0 0.0
    %364 = vmatprep.mubr.f32.mxu0 0.0
    %365 = vmatmul.mubr.f32.gmra.mrb[0].mxu0 %v275
    %v366 = vpop.f32.mrb[0].mxu0
    %v367 = vadd.f32 %v298, %v366
    %v368 = vpop.f32.mrb[0].mxu0
    %369 = vdwg.mxu0
    %370 = vmax.xlane.f32.xlu0 %v367
    %v371 = vpop.xlane.xlu0 %370
    %v372 = vsub.f32 %v367, %v371
    %v373 = vmul.f32 %v372, 1.442695
    %v374 = vpow.pop %v373
    %375 = vadd.xlane.f32.xlu0 %v374
    %v376 = vpop.xlane.xlu0 %375
    %v377 = vrcp.pop %v376
    %v378 = vmul.f32 %v376, %v377
    %v379 = vsub.f32 2.0, %v378
    %v380 = vmul.f32 %v377, %v379
    %v381 = vmul.f32 %v374, %v380
    %382 = vst [vmem:[#allocation10] sm:$0xff] %v367
    %383 = vst [vmem:[#allocation11] sm:$0xff] %v381
    // Predicated region
    $region46: #{tpu_custom_call.1} parent=1 // pred_check
      _
    $region47: #{tpu_custom_call.1} parent=1 // pred_check_branch
      %385 = sbr.rel (0) target = $region49
    $region48: #{tpu_custom_call.1} parent=1 // pred_region
      %s387 = ssub.s32 128, 128
      %388 = vsyncadd [#allocation4], %s387
      %s390 = sshll.u32 [#allocation10], 4
      %s391 = int_to_ptr.vmem [resolvable:$true] %s390
      %393 = dma.vmem_to_hbm [thread:$0]  %s391, 128, %s7, [#allocation4]
    $region49: #{tpu_custom_call.1} parent=1 // pred_fallthru
      _
    // Predicated region
    $region50: #{tpu_custom_call.1} parent=1 // pred_check
      _
    $region51: #{tpu_custom_call.1} parent=1 // pred_check_branch
      %395 = sbr.rel (0) target = $region53
    $region52: #{tpu_custom_call.1} parent=1 // pred_region
      %s397 = ssub.s32 128, 128
      %398 = vsyncadd [#allocation12], %s397
      %s400 = sshll.u32 [#allocation11], 4
      %s401 = int_to_ptr.vmem [resolvable:$true] %s400
      %403 = dma.vmem_to_hbm [thread:$0]  %s401, 128, %s8, [#allocation12]
    $region53: #{tpu_custom_call.1} parent=1 // pred_fallthru
      _
    // Predicated region
    $region54: #{tpu_custom_call.1} parent=1 // pred_check
      _
    $region55: #{tpu_custom_call.1} parent=1 // pred_check_branch
      %405 = sbr.rel (0) target = $region57
    $region56: #{tpu_custom_call.1} parent=1 // pred_region
      %s407 = ssub.s32 128, 128
      %408 = vsyncadd [#allocation12], %s407
      %s410 = sshll.u32 [#allocation13], 4
      %s411 = int_to_ptr.vmem [resolvable:$true] %s410
      %413 = dma.vmem_to_hbm [thread:$0]  %s411, 128, %s9, [#allocation12]
    $region57: #{tpu_custom_call.1} parent=1 // pred_fallthru
      _
    // Predicated region
    $region58: #{tpu_custom_call.1} parent=1 // pred_check
      _
    $region59: #{tpu_custom_call.1} parent=1 // pred_check_branch
      %415 = sbr.rel (0) target = $region61
    $region60: #{tpu_custom_call.1} parent=1 // pred_region
      %s417 = ssub.s32 128, 128
      %418 = vsyncadd [#allocation15], %s417
      %s420 = sshll.u32 [#allocation14], 4
      %s421 = int_to_ptr.vmem [resolvable:$true] %s420
      %423 = dma.vmem_to_hbm [thread:$0]  %s421, 128, %s10, [#allocation15]
    $region61: #{tpu_custom_call.1} parent=1 // pred_fallthru
      _
    // Predicated region
    $region62: #{tpu_custom_call.1} parent=1 // pred_check
      _
    $region63: #{tpu_custom_call.1} parent=1 // pred_check_branch
      %425 = sbr.rel (0) target = $region65
    $region64: #{tpu_custom_call.1} parent=1 // pred_region
      %426 = dma.done [#allocation4], 128
    $region65: #{tpu_custom_call.1} parent=1 // pred_fallthru
      _
    // Predicated region
    $region66: #{tpu_custom_call.1} parent=1 // pred_check
      _
    $region67: #{tpu_custom_call.1} parent=1 // pred_check_branch
      %428 = sbr.rel (0) target = $region69
    $region68: #{tpu_custom_call.1} parent=1 // pred_region
      %429 = dma.done [#allocation12], 128
    $region69: #{tpu_custom_call.1} parent=1 // pred_fallthru
      _
    // Predicated region
    $region70: #{tpu_custom_call.1} parent=1 // pred_check
      _
    $region71: #{tpu_custom_call.1} parent=1 // pred_check_branch
      %431 = sbr.rel (0) target = $region73
    $region72: #{tpu_custom_call.1} parent=1 // pred_region
      %432 = dma.done [#allocation12], 128
    $region73: #{tpu_custom_call.1} parent=1 // pred_fallthru
      _
    // Predicated region
    $region74: #{tpu_custom_call.1} parent=1 // pred_check
      _
    $region75: #{tpu_custom_call.1} parent=1 // pred_check_branch
      %434 = sbr.rel (0) target = $region77
    $region76: #{tpu_custom_call.1} parent=1 // pred_region
      %435 = dma.done [#allocation15], 128
    $region77: #{tpu_custom_call.1} parent=1 // pred_fallthru
      _
    %436 = vsyncpa [#allocation3], 1
    %437 = vsyncpa [#allocation6], 1
    %438 = vsyncpa [#allocation9], 1
    %439 = vsyncpa [#allocation4], 1
    %440 = vsyncpa [#allocation12], 1
    %441 = vsyncpa [#allocation15], 1

</llo_original>
